<compile_context>
chip_gen: v5e
topology: v5e:2x2
jax: 0.10.0
libtpu: 0.0.40
codegen_flags: <defaults>
</compile_context>

<pallas_src>
import functools

import jax
import jax.numpy as jnp
from jax.experimental import pallas as pl
from jax.experimental.pallas import tpu as pltpu

HID1 = 128      # first hidden width (already lane-aligned)
HID2 = 64       # second hidden width of the PyTorch model
LANE = 128      # TPU lane width; hidden2 / output are padded up to this
SUB_ALIGN = 16  # bf16 packs 16 rows per sublane tile -> keep slab offsets aligned


def _round_up(n, m):
    return ((n + m - 1) // m) * m


def _bf16_elementwise_ok():
    """bf16 VPU exists on v6e/v7x; keep f32 elementwise on v5e/v4."""
    try:
        kind = jax.devices()[0].device_kind.lower()
    except Exception:  # pragma: no cover - defensive
        return False
    return ("v6" in kind) or ("v7" in kind)


def _choose_tile(batch, max_tile):
    """Pick the batch tile.

    - tiny batches (<=256): one tile, rounded to 8 sublanes (grid == 1).
    - otherwise: at least 2 grid steps (both v7x TCs get work), tile a multiple
      of 256 (full MXU M on v6e/v7x), capped at max_tile to amortize the
      ~0.35us per-step pipeline overhead while staying well inside VMEM.
    """
    if batch <= 256:
        return _round_up(batch, 8)
    half = _round_up(-(-batch // 2), 256)
    return min(_round_up(max_tile, 256), half)


def dqn_kernel(x_ref, w_ref, b_ref, o_ref, *, in_features, in_pad, bf16_elem):
    """One batch tile of the fused 3-layer MLP.

    x_ref : (TB, in_features)        f32  (cast to bf16 in-kernel)
    w_ref : (in_pad + 2*128, 128)    bf16 rows = [w1 | w2_pad | w3_pad]
    b_ref : (8, 128)                 f32  rows 0..2 = b1, b2_pad, b3_pad
    o_ref : (TB, 128)                bf16/f32 lane-dense padded Q-values
    """
    x = x_ref[...].astype(jnp.bfloat16)
    w1 = w_ref[0:in_features, :]
    w2 = w_ref[in_pad:in_pad + LANE, :]
    w3 = w_ref[in_pad + LANE:in_pad + 2 * LANE, :]
    b3 = b_ref[2:3, :]

    # MXU matmuls: bf16 operands, f32 accumulation.
    h1 = jnp.dot(x, w1, preferred_element_type=jnp.float32)
    if bf16_elem:
        # Native bf16 VALU (v6e/v7x): halve intermediate ld/st traffic, no
        # separate full-tile cast pass before the next matmul.
        b1 = b_ref[0:1, :].astype(jnp.bfloat16)
        b2 = b_ref[1:2, :].astype(jnp.bfloat16)
        h1 = jnp.maximum(h1.astype(jnp.bfloat16) + b1, 0)
        h2 = jnp.dot(h1, w2, preferred_element_type=jnp.float32)
        h2 = jnp.maximum(h2.astype(jnp.bfloat16) + b2, 0)
        out = jnp.dot(h2, w3, preferred_element_type=jnp.float32)
    else:
        # v5e path: no bf16 VPU, keep elementwise work in f32.
        b1 = b_ref[0:1, :]
        b2 = b_ref[1:2, :]
        h1 = jnp.maximum(h1 + b1, 0.0)
        h2 = jnp.dot(h1.astype(jnp.bfloat16), w2, preferred_element_type=jnp.float32)
        h2 = jnp.maximum(h2 + b2, 0.0)
        out = jnp.dot(h2.astype(jnp.bfloat16), w3, preferred_element_type=jnp.float32)

    o_ref[...] = (out + b3).astype(o_ref.dtype)


def pack_params(w1, b1, w2, b2, w3, b3):
    """Pack params into one bf16 weight slab + one f32 bias slab.

    w1: (in, 128), w2: (128, 64), w3: (64, out); biases are 1-D.
    Zero-padding keeps the math exact: padded h2 lanes are relu(0)=0, the
    corresponding w3 rows are 0, padded output lanes are 0 and get sliced off.
    w1 rows are padded to a multiple of 16 only so the w2/w3 slab offsets stay
    bf16-sublane aligned (the kernel only reads w1[:in_features]).
    """
    in_features = w1.shape[0]
    out_features = w3.shape[1]
    in_pad = _round_up(in_features, SUB_ALIGN)

    w1p = jnp.zeros((in_pad, LANE), jnp.float32).at[:in_features, :].set(w1)
    w2p = jnp.zeros((LANE, LANE), jnp.float32).at[:, :HID2].set(w2)
    w3p = jnp.zeros((LANE, LANE), jnp.float32).at[:HID2, :out_features].set(w3)
    w_packed = jnp.concatenate([w1p, w2p, w3p], axis=0).astype(jnp.bfloat16)

    b_packed = jnp.zeros((8, LANE), jnp.float32)
    b_packed = b_packed.at[0, :HID1].set(jnp.reshape(b1, (-1,)))
    b_packed = b_packed.at[1, :HID2].set(jnp.reshape(b2, (-1,)))
    b_packed = b_packed.at[2, :out_features].set(jnp.reshape(b3, (-1,)))
    return w_packed, b_packed


@functools.partial(jax.jit,
                   static_argnames=("output_size", "max_tile", "out_dtype"))
def dqn_forward(x, w_packed, b_packed, *, output_size, max_tile=2048,
                out_dtype=jnp.bfloat16):
    # NOTE: out_dtype=jnp.float32 if the Q-values feed a TD-error loss and you
    # want the final add/store in full precision; bf16 is fine for acting.
    batch, in_features = x.shape
    in_pad = w_packed.shape[0] - 2 * LANE
    assert in_pad == _round_up(in_features, SUB_ALIGN), "w_packed/x mismatch"

    tb = _choose_tile(batch, max_tile)
    grid = (pl.cdiv(batch, tb),)
    bf16_elem = _bf16_elementwise_ok()

    kernel = functools.partial(dqn_kernel, in_features=in_features,
                               in_pad=in_pad, bf16_elem=bf16_elem)

    flops = 2 * batch * (in_features * LANE + LANE * LANE + LANE * LANE)
    bytes_accessed = (x.size * x.dtype.itemsize
                      + w_packed.size * 2 + b_packed.size * 4
                      + batch * LANE * jnp.dtype(out_dtype).itemsize)

    out = pl.pallas_call(
        kernel,
        out_shape=jax.ShapeDtypeStruct((batch, LANE), out_dtype),
        grid=grid,
        in_specs=[
            # x: ragged last block handled by Pallas; rows are independent so
            # any garbage tail rows never reach the (row-masked) output store.
            pl.BlockSpec((tb, in_features), lambda i: (i, 0)),
            # weights/biases: constant block index -> DMA'd once, resident.
            pl.BlockSpec(w_packed.shape, lambda i: (0, 0)),
            pl.BlockSpec(b_packed.shape, lambda i: (0, 0)),
        ],
        out_specs=pl.BlockSpec((tb, LANE), lambda i: (i, 0)),  # lane-dense out
        compiler_params=pltpu.CompilerParams(
            dimension_semantics=("parallel",)),                # 2 TCs on v7x
        cost_estimate=pl.CostEstimate(
            flops=flops, transcendentals=0, bytes_accessed=bytes_accessed),
    )(x, w_packed, b_packed)

    return out[:, :output_size]


def init_linear_params(key, fan_in, fan_out):
    """torch.nn.Linear-style uniform(+-1/sqrt(fan_in)) init, W as (in, out)."""
    kw, kb = jax.random.split(key)
    bound = 1.0 / jnp.sqrt(jnp.asarray(fan_in, jnp.float32))
    w = jax.random.uniform(kw, (fan_in, fan_out), jnp.float32, -bound, bound)
    b = jax.random.uniform(kb, (fan_out,), jnp.float32, -bound, bound)
    return w, b


def reference_forward(x, w1, b1, w2, b2, w3, b3):
    h1 = jnp.maximum(x @ w1 + b1, 0.0)
    h2 = jnp.maximum(h1 @ w2 + b2, 0.0)
    return h2 @ w3 + b3


if __name__ == "__main__":
    # Small, self-consistent shapes: flat observation vector -> Q-values.
    # TODO(synk): gym env / replay buffer / optimizer are not part of forward().
    input_size = 32    # stand-in for env.observation_space.shape[0]
    output_size = 4    # stand-in for env.action_space.n

    key = jax.random.PRNGKey(0)
    kx_small, kx_big, k1, k2, k3 = jax.random.split(key, 5)

    w1, b1 = init_linear_params(k1, input_size, HID1)
    w2, b2 = init_linear_params(k2, HID1, HID2)
    w3, b3 = init_linear_params(k3, HID2, output_size)
    w_packed, b_packed = pack_params(w1, b1, w2, b2, w3, b3)

    # batch=8 exercises the tiny single-tile path; batch=300 exercises the
    # two-step grid (256-row tiles, ragged last block) used to feed both v7x TCs.
    for kk, batch in ((kx_small, 8), (kx_big, 300)):
        x = jax.random.normal(kk, (batch, input_size), jnp.float32)
        out = jax.block_until_ready(
            dqn_forward(x, w_packed, b_packed, output_size=output_size))
        ref = reference_forward(x, w1, b1, w2, b2, w3, b3)
        assert out.shape == (batch, output_size)
        # bf16 matmul operands / bf16 output with f32 accumulation -> relaxed tol.
        assert jnp.allclose(out.astype(jnp.float32), ref, atol=3e-2, rtol=3e-2), \
            "mismatch vs reference"

    print("KERNEL_OK")
</pallas_src>

<mosaic_0001>
module attributes {stable_mosaic.version = 11 : i64} {
  func.func @dqn_kernel(%arg0: i32, %arg1: memref<8x32xf32, #tpu.memory_space<vmem>>, %arg2: memref<288x128xbf16, #tpu.memory_space<vmem>>, %arg3: memref<8x128xf32, #tpu.memory_space<vmem>>, %arg4: memref<8x128xbf16, #tpu.memory_space<vmem>>) attributes {dimension_semantics = [#tpu.dimension_semantics<parallel>], iteration_bounds = array<i64: 1>, scalar_prefetch = 0 : i64, scratch_operands = 0 : i64, tpu.core_type = #tpu.core_type<tc>, window_params = [{transform_indices = @transform_0, window_bounds = array<i64: 8, 32>}, {pipeline_mode = #tpu.pipeline_mode<synchronous>, transform_indices = @transform_1, window_bounds = array<i64: 288, 128>}, {pipeline_mode = #tpu.pipeline_mode<synchronous>, transform_indices = @transform_2, window_bounds = array<i64: 8, 128>}, {transform_indices = @transform_3, window_bounds = array<i64: 8, 128>}]} {
    %c0 = arith.constant 0 : index
    %c0_0 = arith.constant 0 : index
    %0 = vector.load %arg1[%c0, %c0_0] : memref<8x32xf32, #tpu.memory_space<vmem>>, vector<8x32xf32>
    %1 = arith.truncf %0 : vector<8x32xf32> to vector<8x32xbf16>
    %c0_1 = arith.constant 0 : index
    %c0_2 = arith.constant 0 : index
    %2 = vector.load %arg2[%c0_1, %c0_2] : memref<288x128xbf16, #tpu.memory_space<vmem>>, vector<32x128xbf16>
    %c32 = arith.constant 32 : index
    %c0_3 = arith.constant 0 : index
    %3 = vector.load %arg2[%c32, %c0_3] : memref<288x128xbf16, #tpu.memory_space<vmem>>, vector<128x128xbf16>
    %c160 = arith.constant 160 : index
    %c0_4 = arith.constant 0 : index
    %4 = vector.load %arg2[%c160, %c0_4] : memref<288x128xbf16, #tpu.memory_space<vmem>>, vector<128x128xbf16>
    %c2 = arith.constant 2 : index
    %c0_5 = arith.constant 0 : index
    %5 = vector.load %arg3[%c2, %c0_5] : memref<8x128xf32, #tpu.memory_space<vmem>>, vector<1x128xf32>
    %cst = arith.constant dense<0.000000e+00> : vector<8x128xf32>
    %6 = tpu.matmul %1, %2, %cst {dimension_numbers = #tpu.dot_dimension_numbers<[1], [0], [0], [1], [0, 0, 1, 1], [], []>} : vector<8x32xbf16>, vector<32x128xbf16>, vector<8x128xf32> -> vector<8x128xf32>
    %c0_6 = arith.constant 0 : index
    %c0_7 = arith.constant 0 : index
    %7 = vector.load %arg3[%c0_6, %c0_7] : memref<8x128xf32, #tpu.memory_space<vmem>>, vector<1x128xf32>
    %c1 = arith.constant 1 : index
    %c0_8 = arith.constant 0 : index
    %8 = vector.load %arg3[%c1, %c0_8] : memref<8x128xf32, #tpu.memory_space<vmem>>, vector<1x128xf32>
    %9 = vector.broadcast %7 : vector<1x128xf32> to vector<8x128xf32>
    %10 = arith.addf %6, %9 : vector<8x128xf32>
    %cst_9 = arith.constant 0.000000e+00 : f32
    %11 = vector.broadcast %cst_9 : f32 to vector<8x128xf32>
    %12 = arith.maximumf %10, %11 : vector<8x128xf32>
    %13 = arith.truncf %12 : vector<8x128xf32> to vector<8x128xbf16>
    %cst_10 = arith.constant dense<0.000000e+00> : vector<8x128xf32>
    %14 = tpu.matmul %13, %3, %cst_10 {dimension_numbers = #tpu.dot_dimension_numbers<[1], [0], [0], [1], [0, 0, 1, 1], [], []>} : vector<8x128xbf16>, vector<128x128xbf16>, vector<8x128xf32> -> vector<8x128xf32>
    %15 = vector.broadcast %8 : vector<1x128xf32> to vector<8x128xf32>
    %16 = arith.addf %14, %15 : vector<8x128xf32>
    %cst_11 = arith.constant 0.000000e+00 : f32
    %17 = vector.broadcast %cst_11 : f32 to vector<8x128xf32>
    %18 = arith.maximumf %16, %17 : vector<8x128xf32>
    %19 = arith.truncf %18 : vector<8x128xf32> to vector<8x128xbf16>
    %cst_12 = arith.constant dense<0.000000e+00> : vector<8x128xf32>
    %20 = tpu.matmul %19, %4, %cst_12 {dimension_numbers = #tpu.dot_dimension_numbers<[1], [0], [0], [1], [0, 0, 1, 1], [], []>} : vector<8x128xbf16>, vector<128x128xbf16>, vector<8x128xf32> -> vector<8x128xf32>
    %21 = vector.broadcast %5 : vector<1x128xf32> to vector<8x128xf32>
    %22 = arith.addf %20, %21 : vector<8x128xf32>
    %23 = arith.truncf %22 : vector<8x128xf32> to vector<8x128xbf16>
    %c0_13 = arith.constant 0 : index
    %c0_14 = arith.constant 0 : index
    %24 = vector.load %arg4[%c0_13, %c0_14] : memref<8x128xbf16, #tpu.memory_space<vmem>>, vector<8x128xbf16>
    tpu.vector_store %arg4[%c0_13, %c0_14], %23 {strides = array<i32>} : memref<8x128xbf16, #tpu.memory_space<vmem>>, vector<8x128xbf16>,
    return
  }
  func.func @transform_0(%arg0: i32) -> (i32, i32) {
    %c0_i32 = arith.constant 0 : i32
    %c0_i32_0 = arith.constant 0 : i32
    return %arg0, %c0_i32 : i32, i32
  }
  func.func @transform_1(%arg0: i32) -> (i32, i32) {
    %c0_i32 = arith.constant 0 : i32
    %c0_i32_0 = arith.constant 0 : i32
    %c0_i32_1 = arith.constant 0 : i32
    return %c0_i32, %c0_i32_0 : i32, i32
  }
  func.func @transform_2(%arg0: i32) -> (i32, i32) {
    %c0_i32 = arith.constant 0 : i32
    %c0_i32_0 = arith.constant 0 : i32
    %c0_i32_1 = arith.constant 0 : i32
    return %c0_i32, %c0_i32_0 : i32, i32
  }
  func.func @transform_3(%arg0: i32) -> (i32, i32) {
    %c0_i32 = arith.constant 0 : i32
    %c0_i32_0 = arith.constant 0 : i32
    return %arg0, %c0_i32 : i32, i32
  }
}

</mosaic_0001>

<llo_original>
// kernel: dqn_forward.1
$region0: #{dqn_forward.1}
  #allocation0 [shape = 'u32[]', space=smem, size = 0x4, offset = 0x4, fixed_abs, tag = 'smem constant byte address 0x4 - core index']
  #allocation1 [shape = 'u32[72,128]{1,0:T(1,128)}', space=vmem, size = 0x9000, scoped, tag = 'internal scratch']
  %s0 = inlined_call_operand.hbm [shape: f32[8,32], index: 0, kind: input, shape index: {}]
  %s1 = inlined_call_operand.hbm [shape: bf16[288,128], index: 1, kind: input, shape index: {}]
  %s2 = inlined_call_operand.hbm [shape: f32[8,128], index: 2, kind: input, shape index: {}]
  %s3 = inlined_call_operand.vmem [shape: bf16[8,128], index: 3, kind: output, shape index: {}]
  %s4 = sld [smem:[#allocation0]]
  $region34: #{dqn_forward.1} parent=0
    _
  %s6 = ssub.s32 1, %s4
  %s7 = scalar_select 0, %s6, %s4
  $region1: #{dqn_forward.1} parent=0
    #allocation2 [shape = 'u8[4096]{0}', space=vmem, size = 0x1000, scoped, tag = 'input window, operand 0, single buffered']
    #allocation3 [shape = 's32[1]{0}', space=sflag, size = 0x4, scoped, tag = 'scoped memory for dqn_forward.1']
    #allocation4 [shape = 'u8[73728]{0}', space=vmem, size = 0x12000, scoped, tag = 'input window, operand 1, single buffered']
    #allocation5 [shape = 's32[1]{0}', space=sflag, size = 0x4, scoped, tag = 'scoped memory for dqn_forward.1']
    #allocation6 [shape = 'u8[4096]{0}', space=vmem, size = 0x1000, scoped, tag = 'input window, operand 2, single buffered']
    %8 = vsyncpa [#allocation3], 0
    %9 = vsyncpa [#allocation5], 0
    // Predicated region
    $region2: #{dqn_forward.1} parent=1 // pred_check
      _
    $region3: #{dqn_forward.1} parent=1 // pred_check_branch
      %11 = sbr.rel (0) target = $region5
    $region4: #{dqn_forward.1} parent=1 // pred_region
      %13 = vsyncadd [#allocation3], 0
      %s15 = sshll.u32 %s0, 4
      %s16 = int_to_ptr.hbm [resolvable:$true] %s15
      %s17 = sshll.u32 [#allocation2], 4
      %s18 = int_to_ptr.vmem [resolvable:$true] %s17
      %20 = dma.hbm_to_vmem [thread:$0]  %s16, 128, %s18, [#allocation3]
    $region5: #{dqn_forward.1} parent=1 // pred_fallthru
      _
    // Predicated region
    $region6: #{dqn_forward.1} parent=1 // pred_check
      _
    $region7: #{dqn_forward.1} parent=1 // pred_check_branch
      %22 = sbr.rel (0) target = $region9
    $region8: #{dqn_forward.1} parent=1 // pred_region
      %24 = vsyncadd [#allocation5], 0
      %s25 = sshll.u32 %s1, 4
      %s26 = int_to_ptr.hbm [resolvable:$true] %s25
      %s27 = sshll.u32 [#allocation4], 4
      %s28 = int_to_ptr.vmem [resolvable:$true] %s27
      %33 = dma.hbm_to_vmem [thread:$0]  %s26, 2304, %s28, [#allocation5], 64, 64, 4
    $region9: #{dqn_forward.1} parent=1 // pred_fallthru
      _
    // Predicated region
    $region10: #{dqn_forward.1} parent=1 // pred_check
      _
    $region11: #{dqn_forward.1} parent=1 // pred_check_branch
      %35 = sbr.rel (0) target = $region13
    $region12: #{dqn_forward.1} parent=1 // pred_region
      %37 = vsyncadd [#allocation5], 0
      %s39 = sshll.u32 %s2, 4
      %s40 = int_to_ptr.hbm [resolvable:$true] %s39
      %s41 = sshll.u32 [#allocation6], 4
      %s42 = int_to_ptr.vmem [resolvable:$true] %s41
      %44 = dma.hbm_to_vmem [thread:$0]  %s40, 128, %s42, [#allocation5]
    $region13: #{dqn_forward.1} parent=1 // pred_fallthru
      _
    // Predicated region
    $region14: #{dqn_forward.1} parent=1 // pred_check
      _
    $region15: #{dqn_forward.1} parent=1 // pred_check_branch
      %46 = sbr.rel (0) target = $region17
    $region16: #{dqn_forward.1} parent=1 // pred_region
      %48 = dma.done [#allocation3], 128
    $region17: #{dqn_forward.1} parent=1 // pred_fallthru
      _
    // Predicated region
    $region18: #{dqn_forward.1} parent=1 // pred_check
      _
    $region19: #{dqn_forward.1} parent=1 // pred_check_branch
      %50 = sbr.rel (0) target = $region21
    $region20: #{dqn_forward.1} parent=1 // pred_region
      %52 = dma.done [#allocation5], 2304
    $region21: #{dqn_forward.1} parent=1 // pred_fallthru
      _
    // Predicated region
    $region22: #{dqn_forward.1} parent=1 // pred_check
      _
    $region23: #{dqn_forward.1} parent=1 // pred_check_branch
      %54 = sbr.rel (0) target = $region25
    $region24: #{dqn_forward.1} parent=1 // pred_region
      %56 = dma.done [#allocation5], 128
    $region25: #{dqn_forward.1} parent=1 // pred_fallthru
      _
    %v58 = vld [vmem:[#allocation2] sm:$0xff]
    %v59 = vpack.c.bf16 %v58, %v58
    %v60 = vld [vmem:[#allocation4] sm:$0xf]
    %v61 = vld [vmem:[#allocation4 + $0x4] sm:$0xf]
    %v62 = vld [vmem:[#allocation4 + $0x8] sm:$0xf]
    %v63 = vld [vmem:[#allocation4 + $0xc] sm:$0xf]
    %v64 = vld [vmem:[#allocation4 + $0x10] sm:$0xf]
    %v65 = vld [vmem:[#allocation4 + $0x14] sm:$0xf]
    %v66 = vld [vmem:[#allocation4 + $0x18] sm:$0xf]
    %v67 = vld [vmem:[#allocation4 + $0x1c] sm:$0xf]
    %v68 = vld [vmem:[#allocation4 + $0x20] sm:$0xf]
    %v69 = vld [vmem:[#allocation4 + $0x24] sm:$0xf]
    %v70 = vld [vmem:[#allocation4 + $0x28] sm:$0xf]
    %v71 = vld [vmem:[#allocation4 + $0x2c] sm:$0xf]
    %v72 = vld [vmem:[#allocation4 + $0x30] sm:$0xf]
    %v73 = vld [vmem:[#allocation4 + $0x34] sm:$0xf]
    %v74 = vld [vmem:[#allocation4 + $0x38] sm:$0xf]
    %v75 = vld [vmem:[#allocation4 + $0x3c] sm:$0xf]
    %v76 = vld [vmem:[#allocation4 + $0x40] sm:$0xf]
    %v77 = vld [vmem:[#allocation4 + $0x44] sm:$0xf]
    %v78 = vld [vmem:[#allocation4 + $0x48] sm:$0xf]
    %v79 = vld [vmem:[#allocation4 + $0x4c] sm:$0xf]
    %v80 = vld [vmem:[#allocation4 + $0x50] sm:$0xf]
    %v81 = vld [vmem:[#allocation4 + $0x54] sm:$0xf]
    %v82 = vld [vmem:[#allocation4 + $0x58] sm:$0xf]
    %v83 = vld [vmem:[#allocation4 + $0x5c] sm:$0xf]
    %v84 = vld [vmem:[#allocation4 + $0x60] sm:$0xf]
    %v85 = vld [vmem:[#allocation4 + $0x64] sm:$0xf]
    %v86 = vld [vmem:[#allocation4 + $0x68] sm:$0xf]
    %v87 = vld [vmem:[#allocation4 + $0x6c] sm:$0xf]
    %v88 = vld [vmem:[#allocation4 + $0x70] sm:$0xf]
    %v89 = vld [vmem:[#allocation4 + $0x74] sm:$0xf]
    %v90 = vld [vmem:[#allocation4 + $0x78] sm:$0xf]
    %v91 = vld [vmem:[#allocation4 + $0x7c] sm:$0xf]
    %v92 = vld [vmem:[#allocation4 + $0x80] sm:$0xf]
    %v93 = vld [vmem:[#allocation4 + $0x84] sm:$0xf]
    %v94 = vld [vmem:[#allocation4 + $0x88] sm:$0xf]
    %v95 = vld [vmem:[#allocation4 + $0x8c] sm:$0xf]
    %v96 = vld [vmem:[#allocation6 + $0x2] sm:$0x1]
    %v97 = vld [vmem:[#allocation6] sm:$0x1]
    %v98 = vld [vmem:[#allocation6 + $0x1] sm:$0x1]
    %v99 = vperm.slane %v97, 0
    %v104 = vunpack.c.l.b16 %v60
    %v105 = vunpack.c.l.b16 %v61
    %v106 = vunpack.c.l.b16 %v62
    %v107 = vunpack.c.l.b16 %v63
    %v108 = vpack.c.b16 %v105, %v104
    %v109 = vpack.c.b16 %v107, %v106
    %vm112 = vcmask 261120
    %v114 = vsel %vm112, %v59, 0
    %116 = vmatpush.bf16.msra.mxu0 0
    %117 = vmatpush.bf16.msra.mxu0 0
    %118 = vmatpush.bf16.msra.mxu0 0
    %119 = vmatpush.bf16.msra.mxu0 0
    %120 = vmatpush.bf16.msra.mxu0 0
    %121 = vmatpush.bf16.msra.mxu0 0
    %122 = vmatpush.bf16.msra.mxu0 %v109
    %123 = vmatpush.bf16.msra.mxu0 %v108
    %124 = vmatmul.bf16.gmra.mxu0 %v114
    %v125 = vpop.f32.mrf.mxu0
    %v126 = vadd.f32 %v99, %v125
    %v127 = vpop.f32.mrf.mxu0
    %128 = vdwg.mxu0
    %v129 = vmax.f32 %v126, 0.0
    %v130 = vpack.c.bf16 %v129, %v129
    %v131 = vperm.slane %v98, 0
    %v148 = vunpack.c.l.b16 %v64
    %v149 = vunpack.c.l.b16 %v65
    %v150 = vunpack.c.l.b16 %v66
    %v151 = vunpack.c.l.b16 %v67
    %v152 = vunpack.c.l.b16 %v68
    %v153 = vunpack.c.l.b16 %v69
    %v154 = vunpack.c.l.b16 %v70
    %v155 = vunpack.c.l.b16 %v71
    %v156 = vunpack.c.l.b16 %v72
    %v157 = vunpack.c.l.b16 %v73
    %v158 = vunpack.c.l.b16 %v74
    %v159 = vunpack.c.l.b16 %v75
    %v160 = vunpack.c.l.b16 %v76
    %v161 = vunpack.c.l.b16 %v77
    %v162 = vunpack.c.l.b16 %v78
    %v163 = vunpack.c.l.b16 %v79
    %v164 = vpack.c.b16 %v149, %v148
    %v165 = vpack.c.b16 %v151, %v150
    %v166 = vpack.c.b16 %v153, %v152
    %v167 = vpack.c.b16 %v155, %v154
    %v168 = vpack.c.b16 %v157, %v156
    %v169 = vpack.c.b16 %v159, %v158
    %v170 = vpack.c.b16 %v161, %v160
    %v171 = vpack.c.b16 %v163, %v162
    %180 = vmatpush.bf16.msra.mxu0 %v171
    %181 = vmatpush.bf16.msra.mxu0 %v170
    %182 = vmatpush.bf16.msra.mxu0 %v169
    %183 = vmatpush.bf16.msra.mxu0 %v168
    %184 = vmatpush.bf16.msra.mxu0 %v167
    %185 = vmatpush.bf16.msra.mxu0 %v166
    %186 = vmatpush.bf16.msra.mxu0 %v165
    %187 = vmatpush.bf16.msra.mxu0 %v164
    %188 = vmatmul.bf16.gmra.mxu0 %v130
    %v189 = vpop.f32.mrf.mxu0
    %v190 = vadd.f32 %v131, %v189
    %v191 = vpop.f32.mrf.mxu0
    %192 = vdwg.mxu0
    %v193 = vmax.f32 %v190, 0.0
    %v194 = vpack.c.bf16 %v193, %v193
    %v195 = vperm.slane %v96, 0
    %v212 = vunpack.c.l.b16 %v80
    %v213 = vunpack.c.l.b16 %v81
    %v214 = vunpack.c.l.b16 %v82
    %v215 = vunpack.c.l.b16 %v83
    %v216 = vunpack.c.l.b16 %v84
    %v217 = vunpack.c.l.b16 %v85
    %v218 = vunpack.c.l.b16 %v86
    %v219 = vunpack.c.l.b16 %v87
    %v220 = vunpack.c.l.b16 %v88
    %v221 = vunpack.c.l.b16 %v89
    %v222 = vunpack.c.l.b16 %v90
    %v223 = vunpack.c.l.b16 %v91
    %v224 = vunpack.c.l.b16 %v92
    %v225 = vunpack.c.l.b16 %v93
    %v226 = vunpack.c.l.b16 %v94
    %v227 = vunpack.c.l.b16 %v95
    %v228 = vpack.c.b16 %v213, %v212
    %v229 = vpack.c.b16 %v215, %v214
    %v230 = vpack.c.b16 %v217, %v216
    %v231 = vpack.c.b16 %v219, %v218
    %v232 = vpack.c.b16 %v221, %v220
    %v233 = vpack.c.b16 %v223, %v222
    %v234 = vpack.c.b16 %v225, %v224
    %v235 = vpack.c.b16 %v227, %v226
    %244 = vmatpush.bf16.msra.mxu0 %v235
    %245 = vmatpush.bf16.msra.mxu0 %v234
    %246 = vmatpush.bf16.msra.mxu0 %v233
    %247 = vmatpush.bf16.msra.mxu0 %v232
    %248 = vmatpush.bf16.msra.mxu0 %v231
    %249 = vmatpush.bf16.msra.mxu0 %v230
    %250 = vmatpush.bf16.msra.mxu0 %v229
    %251 = vmatpush.bf16.msra.mxu0 %v228
    %252 = vmatmul.bf16.gmra.mxu0 %v194
    %v253 = vpop.f32.mrf.mxu0
    %v254 = vadd.f32 %v195, %v253
    %v255 = vpop.f32.mrf.mxu0
    %256 = vdwg.mxu0
    %v257 = vpack.c.bf16 %v254, %v254
    %258 = vst [vmem:[%s3] sm:$0xf] %v257
    // Predicated region
    $region26: #{dqn_forward.1} parent=1 // pred_check
      _
    $region27: #{dqn_forward.1} parent=1 // pred_check_branch
      %260 = sbr.rel (0) target = $region29
    $region28: #{dqn_forward.1} parent=1 // pred_region
      _
    $region29: #{dqn_forward.1} parent=1 // pred_fallthru
      _
    // Predicated region
    $region30: #{dqn_forward.1} parent=1 // pred_check
      _
    $region31: #{dqn_forward.1} parent=1 // pred_check_branch
      %262 = sbr.rel (0) target = $region33
    $region32: #{dqn_forward.1} parent=1 // pred_region
      _
    $region33: #{dqn_forward.1} parent=1 // pred_fallthru
      _
    %263 = vsyncpa [#allocation3], 1
    %264 = vsyncpa [#allocation5], 1

</llo_original>
